<compile_context>
chip_gen: v7x
topology: tpu7x:2x2x1
jax: 0.10.0
libtpu: 0.0.40
codegen_flags: <defaults>
</compile_context>

<pallas_src>
import functools

import jax
import jax.numpy as jnp
import numpy as np
from jax.experimental import pallas as pl
from jax.experimental.pallas import tpu as pltpu


def _round_up(x, m):
    return (x + m - 1) // m * m


def dueling_dqn_kernel(x_ref, w1_ref, wh_ref, wo_ref, b_ref, out_ref, *, h1, h2):
    """One batch tile of the fused DuelingDQN forward.

    Output slab (tile_b, 128), f32:
      cols [0:A)  -> adv_j + val   (val folded into every adv column by w_out)
      col   A     -> val           (value-stream output alone)
    The global adv-mean subtraction happens in a tiny JAX epilogue in the wrapper.
    """
    n_out = out_ref.shape[1]

    # Unpack the packed bias bundle (all slice points are 128-lane aligned), f32.
    b1 = b_ref[:, 0:h1]
    bh = b_ref[:, h1:h1 + 2 * h2]
    bo = b_ref[:, h1 + 2 * h2:h1 + 2 * h2 + n_out]

    # Body: relu(x @ W1 + b1)                                   -> (tile_b, h1) f32
    h = jnp.dot(x_ref[...], w1_ref[...], preferred_element_type=jnp.float32) + b1
    h = jnp.maximum(h, 0.0).astype(jnp.bfloat16)

    # Fused adv1|val1: one (tile_b, h1) @ (h1, 2*h2) matmul     -> (tile_b, 2*h2) f32
    hv = jnp.dot(h, wh_ref[...], preferred_element_type=jnp.float32) + bh
    hv = jnp.maximum(hv, 0.0).astype(jnp.bfloat16)

    # Fused block-diagonal adv2|val2 (lane-dense 128-wide result), written once.
    out_ref[...] = jnp.dot(hv, wo_ref[...], preferred_element_type=jnp.float32) + bo


def pack_params(p, num_actions, n_out=128, obs_pad_mult=128):
    """One-time fusion/padding of the per-layer weights into the kernel layout."""
    obs_dim, h1 = p["w1"].shape        # body (e.g. 16 -> 128)
    h2 = p["wa1"].shape[1]             # head width (512)
    A = num_actions
    assert A + 1 <= n_out, "need one spare lane for the val column"

    # Zero-pad W1's input dim so the x tile can be lane-dense (multiple of 128).
    obs_pad = _round_up(obs_dim, obs_pad_mult)
    w1 = jnp.zeros((obs_pad, h1), jnp.float32).at[:obs_dim].set(p["w1"])

    # Fused adv1|val1 weights.
    w_heads = jnp.concatenate([p["wa1"], p["wv1"]], axis=1)             # (h1, 2*h2)

    # Block-diagonal fused adv2|val2:
    #   cols [0:A): adv_j + val   (wa2 block on top, wv2 broadcast underneath)
    #   col   A   : val only      (wv2 underneath, zeros on top)
    w_out = jnp.zeros((2 * h2, n_out), jnp.float32)
    w_out = w_out.at[:h2, :A].set(p["wa2"])
    w_out = w_out.at[h2:, :A].set(jnp.broadcast_to(p["wv2"], (h2, A)))
    w_out = w_out.at[h2:, A].set(p["wv2"][:, 0])

    b_out = jnp.zeros((1, n_out), jnp.float32)
    b_out = b_out.at[0, :A].set(p["ba2"][0] + p["bv2"][0, 0])
    b_out = b_out.at[0, A].set(p["bv2"][0, 0])

    b_heads = jnp.concatenate([p["ba1"], p["bv1"]], axis=1)             # (1, 2*h2)
    biases = jnp.concatenate([p["b1"], b_heads, b_out], axis=1)         # (1, h1+2*h2+n_out)

    return {
        "w1": w1.astype(jnp.bfloat16),
        "w_heads": w_heads.astype(jnp.bfloat16),
        "w_out": w_out.astype(jnp.bfloat16),
        "biases": biases,                     # stays f32: elementwise math is f32
    }


def dueling_dqn_forward(x, packed, *, num_actions, tile_b_max=2048):
    B, obs_dim = x.shape
    obs_pad, h1 = packed["w1"].shape
    h2 = packed["w_heads"].shape[1] // 2
    n_out = packed["w_out"].shape[1]

    # Batch tile: multiple of 16 sublanes (bf16), capped at 2048 so live intermediates
    # (~18 MiB) stay well inside the 48 MiB scoped-VMEM limit on every generation
    # (v7x physical VMEM is 64 MiB).
    tile_b = min(tile_b_max, _round_up(B, 16))
    b_pad = _round_up(B, tile_b)
    n_tiles = b_pad // tile_b

    # Lane-dense, zero-padded x tile (padding rows/cols are sliced away afterwards).
    x_pad = jnp.zeros((b_pad, obs_pad), jnp.bfloat16)
    x_pad = x_pad.at[:B, :obs_dim].set(x.astype(jnp.bfloat16))

    kernel = functools.partial(dueling_dqn_kernel, h1=h1, h2=h2)

    out = pl.pallas_call(
        kernel,
        out_shape=jax.ShapeDtypeStruct((b_pad, n_out), jnp.float32),
        grid_spec=pltpu.PrefetchScalarGridSpec(
            num_scalar_prefetch=0,
            grid=(n_tiles,),                                          # batch tiles only
            in_specs=[
                pl.BlockSpec((tile_b, obs_pad), lambda i: (i, 0)),    # x: pipelined
                pl.BlockSpec((obs_pad, h1), lambda i: (0, 0)),        # weights: resident
                pl.BlockSpec((h1, 2 * h2), lambda i: (0, 0)),
                pl.BlockSpec((2 * h2, n_out), lambda i: (0, 0)),
                pl.BlockSpec((1, h1 + 2 * h2 + n_out), lambda i: (0, 0)),
            ],
            out_specs=pl.BlockSpec((tile_b, n_out), lambda i: (i, 0)),
        ),
        compiler_params=pltpu.CompilerParams(
            # Tiles are fully independent -> shard across v7x's 2 TensorCores.
            dimension_semantics=("parallel",),
            vmem_limit_bytes=48 * 1024 * 1024),
    )(x_pad, packed["w1"], packed["w_heads"], packed["w_out"], packed["biases"])

    # Tiny epilogue (plain JAX, fused by XLA): recover the exact adv values and
    # subtract the global scalar mean, matching `val + adv - adv.mean()`.
    qv = out[:B, :num_actions]                      # adv_j + val
    val = out[:B, num_actions:num_actions + 1]      # val
    adv_mean = jnp.mean(qv - val)                   # == adv.mean() over the real batch
    return qv - adv_mean


def init_params(key, obs_dim, num_actions, hidden_body=128, hidden_head=512):
    """Deterministic init mimicking torch nn.Linear default (uniform +-1/sqrt(fan_in)).
    Weights stored transposed: (in, out). Biases stored as (1, out)."""
    def linear(k, fan_in, fan_out):
        kw, kb = jax.random.split(k)
        bound = 1.0 / np.sqrt(fan_in)
        w = jax.random.uniform(kw, (fan_in, fan_out), jnp.float32, -bound, bound)
        b = jax.random.uniform(kb, (1, fan_out), jnp.float32, -bound, bound)
        return w, b

    k1, k2, k3, k4, k5 = jax.random.split(key, 5)
    w1, b1 = linear(k1, obs_dim, hidden_body)          # SimpleBody fc1
    wa1, ba1 = linear(k2, hidden_body, hidden_head)    # adv1
    wa2, ba2 = linear(k3, hidden_head, num_actions)    # adv2
    wv1, bv1 = linear(k4, hidden_body, hidden_head)    # val1
    wv2, bv2 = linear(k5, hidden_head, 1)              # val2
    return dict(w1=w1, b1=b1, wa1=wa1, ba1=ba1, wa2=wa2, ba2=ba2,
                wv1=wv1, bv1=bv1, wv2=wv2, bv2=bv2)


def reference_forward(x, p):
    h = jax.nn.relu(x @ p["w1"] + p["b1"])
    adv = jax.nn.relu(h @ p["wa1"] + p["ba1"]) @ p["wa2"] + p["ba2"]
    val = jax.nn.relu(h @ p["wv1"] + p["bv1"]) @ p["wv2"] + p["bv2"]
    return val + adv - jnp.mean(adv)


if __name__ == "__main__":
    batch, obs_dim, num_actions = 4, 16, 6
    key = jax.random.PRNGKey(0)
    kx, kp = jax.random.split(key)
    x = jax.random.normal(kx, (batch, obs_dim), jnp.float32)
    params = init_params(kp, obs_dim, num_actions)
    packed = pack_params(params, num_actions)

    fwd = jax.jit(functools.partial(dueling_dqn_forward, num_actions=num_actions))
    out = fwd(x, packed)
    out = jax.block_until_ready(out)

    ref = reference_forward(x, params)
    assert out.shape == (batch, num_actions)
    # Tolerance accounts for the bf16 weight/activation cast (f32 accumulation).
    np.testing.assert_allclose(np.asarray(out), np.asarray(ref), rtol=2e-2, atol=2e-2)
    print("KERNEL_OK")
</pallas_src>

<mosaic_0001>
module attributes {stable_mosaic.version = 11 : i64} {
  func.func @dueling_dqn_kernel(%arg0: i32, %arg1: memref<16x128xbf16, #tpu.memory_space<vmem>>, %arg2: memref<128x128xbf16, #tpu.memory_space<vmem>>, %arg3: memref<128x1024xbf16, #tpu.memory_space<vmem>>, %arg4: memref<1024x128xbf16, #tpu.memory_space<vmem>>, %arg5: memref<1x1280xf32, #tpu.memory_space<vmem>>, %arg6: memref<16x128xf32, #tpu.memory_space<vmem>>) attributes {dimension_semantics = [#tpu.dimension_semantics<parallel>], iteration_bounds = array<i64: 1>, scalar_prefetch = 0 : i64, scratch_operands = 0 : i64, tpu.core_type = #tpu.core_type<tc>, window_params = [{transform_indices = @transform_0, window_bounds = array<i64: 16, 128>}, {pipeline_mode = #tpu.pipeline_mode<synchronous>, transform_indices = @transform_1, window_bounds = array<i64: 128, 128>}, {pipeline_mode = #tpu.pipeline_mode<synchronous>, transform_indices = @transform_2, window_bounds = array<i64: 128, 1024>}, {pipeline_mode = #tpu.pipeline_mode<synchronous>, transform_indices = @transform_3, window_bounds = array<i64: 1024, 128>}, {pipeline_mode = #tpu.pipeline_mode<synchronous>, transform_indices = @transform_4, window_bounds = array<i64: 1, 1280>}, {transform_indices = @transform_5, window_bounds = array<i64: 16, 128>}]} {
    %c0 = arith.constant 0 : index
    %c0_0 = arith.constant 0 : index
    %0 = vector.load %arg5[%c0, %c0_0] : memref<1x1280xf32, #tpu.memory_space<vmem>>, vector<1x128xf32>
    %c0_1 = arith.constant 0 : index
    %c128 = arith.constant 128 : index
    %1 = vector.load %arg5[%c0_1, %c128] : memref<1x1280xf32, #tpu.memory_space<vmem>>, vector<1x1024xf32>
    %c0_2 = arith.constant 0 : index
    %c1152 = arith.constant 1152 : index
    %2 = vector.load %arg5[%c0_2, %c1152] : memref<1x1280xf32, #tpu.memory_space<vmem>>, vector<1x128xf32>
    %c0_3 = arith.constant 0 : index
    %c0_4 = arith.constant 0 : index
    %3 = vector.load %arg1[%c0_3, %c0_4] : memref<16x128xbf16, #tpu.memory_space<vmem>>, vector<16x128xbf16>
    %c0_5 = arith.constant 0 : index
    %c0_6 = arith.constant 0 : index
    %4 = vector.load %arg2[%c0_5, %c0_6] : memref<128x128xbf16, #tpu.memory_space<vmem>>, vector<128x128xbf16>
    %cst = arith.constant dense<0.000000e+00> : vector<16x128xf32>
    %5 = tpu.matmul %3, %4, %cst {dimension_numbers = #tpu.dot_dimension_numbers<[1], [0], [0], [1], [0, 0, 1, 1], [], []>} : vector<16x128xbf16>, vector<128x128xbf16>, vector<16x128xf32> -> vector<16x128xf32>
    %6 = vector.broadcast %0 : vector<1x128xf32> to vector<16x128xf32>
    %7 = arith.addf %5, %6 : vector<16x128xf32>
    %cst_7 = arith.constant 0.000000e+00 : f32
    %8 = vector.broadcast %cst_7 : f32 to vector<16x128xf32>
    %9 = arith.maximumf %7, %8 : vector<16x128xf32>
    %10 = arith.truncf %9 : vector<16x128xf32> to vector<16x128xbf16>
    %c0_8 = arith.constant 0 : index
    %c0_9 = arith.constant 0 : index
    %11 = vector.load %arg3[%c0_8, %c0_9] : memref<128x1024xbf16, #tpu.memory_space<vmem>>, vector<128x1024xbf16>
    %cst_10 = arith.constant dense<0.000000e+00> : vector<16x1024xf32>
    %12 = tpu.matmul %10, %11, %cst_10 {dimension_numbers = #tpu.dot_dimension_numbers<[1], [0], [0], [1], [0, 0, 1, 1], [], []>} : vector<16x128xbf16>, vector<128x1024xbf16>, vector<16x1024xf32> -> vector<16x1024xf32>
    %13 = vector.broadcast %1 : vector<1x1024xf32> to vector<16x1024xf32>
    %14 = arith.addf %12, %13 : vector<16x1024xf32>
    %cst_11 = arith.constant 0.000000e+00 : f32
    %15 = vector.broadcast %cst_11 : f32 to vector<16x1024xf32>
    %16 = arith.maximumf %14, %15 : vector<16x1024xf32>
    %17 = arith.truncf %16 : vector<16x1024xf32> to vector<16x1024xbf16>
    %c0_12 = arith.constant 0 : index
    %c0_13 = arith.constant 0 : index
    %18 = vector.load %arg4[%c0_12, %c0_13] : memref<1024x128xbf16, #tpu.memory_space<vmem>>, vector<1024x128xbf16>
    %cst_14 = arith.constant dense<0.000000e+00> : vector<16x128xf32>
    %19 = tpu.matmul %17, %18, %cst_14 {dimension_numbers = #tpu.dot_dimension_numbers<[1], [0], [0], [1], [0, 0, 1, 1], [], []>} : vector<16x1024xbf16>, vector<1024x128xbf16>, vector<16x128xf32> -> vector<16x128xf32>
    %20 = vector.broadcast %2 : vector<1x128xf32> to vector<16x128xf32>
    %21 = arith.addf %19, %20 : vector<16x128xf32>
    %c0_15 = arith.constant 0 : index
    %c0_16 = arith.constant 0 : index
    %22 = vector.load %arg6[%c0_15, %c0_16] : memref<16x128xf32, #tpu.memory_space<vmem>>, vector<16x128xf32>
    tpu.vector_store %arg6[%c0_15, %c0_16], %21 {strides = array<i32>} : memref<16x128xf32, #tpu.memory_space<vmem>>, vector<16x128xf32>,
    return
  }
  func.func @transform_0(%arg0: i32) -> (i32, i32) {
    %c0_i32 = arith.constant 0 : i32
    %c0_i32_0 = arith.constant 0 : i32
    return %arg0, %c0_i32 : i32, i32
  }
  func.func @transform_1(%arg0: i32) -> (i32, i32) {
    %c0_i32 = arith.constant 0 : i32
    %c0_i32_0 = arith.constant 0 : i32
    %c0_i32_1 = arith.constant 0 : i32
    return %c0_i32, %c0_i32_0 : i32, i32
  }
  func.func @transform_2(%arg0: i32) -> (i32, i32) {
    %c0_i32 = arith.constant 0 : i32
    %c0_i32_0 = arith.constant 0 : i32
    %c0_i32_1 = arith.constant 0 : i32
    return %c0_i32, %c0_i32_0 : i32, i32
  }
  func.func @transform_3(%arg0: i32) -> (i32, i32) {
    %c0_i32 = arith.constant 0 : i32
    %c0_i32_0 = arith.constant 0 : i32
    %c0_i32_1 = arith.constant 0 : i32
    return %c0_i32, %c0_i32_0 : i32, i32
  }
  func.func @transform_4(%arg0: i32) -> (i32, i32) {
    %c0_i32 = arith.constant 0 : i32
    %c0_i32_0 = arith.constant 0 : i32
    %c0_i32_1 = arith.constant 0 : i32
    return %c0_i32, %c0_i32_0 : i32, i32
  }
  func.func @transform_5(%arg0: i32) -> (i32, i32) {
    %c0_i32 = arith.constant 0 : i32
    %c0_i32_0 = arith.constant 0 : i32
    return %arg0, %c0_i32 : i32, i32
  }
}

</mosaic_0001>

<llo_original>
// kernel: dueling_dqn_forward.1
$region0: #{dueling_dqn_forward.1}
  #allocation0 [shape = 'u32[]', space=smem, size = 0x4, offset = 0x4, fixed_abs, tag = 'smem constant byte address 0x4 - core index']
  #allocation1 [shape = 'u32[144,128]{1,0:T(1,128)}', space=vmem, size = 0x12000, scoped, tag = 'internal scratch']
  %s0 = inlined_call_operand.vmem [shape: bf16[16,128], index: 0, kind: input, shape index: {}]
  %s1 = inlined_call_operand.hbm [shape: bf16[128,128], index: 1, kind: input, shape index: {}]
  %s2 = inlined_call_operand.hbm [shape: bf16[128,1024], index: 2, kind: input, shape index: {}]
  %s3 = inlined_call_operand.hbm [shape: bf16[1024,128], index: 3, kind: input, shape index: {}]
  %s4 = inlined_call_operand.vmem [shape: f32[1,1280], index: 4, kind: input, shape index: {}]
  %s5 = inlined_call_operand.vmem [shape: f32[16,128], index: 5, kind: output, shape index: {}]
  %s6 = sld [smem:[#allocation0]]
  $region42: #{dueling_dqn_forward.1} parent=0
    _
  %s8 = ssub.s32 1, %s6
  %s9 = scalar_select 0, %s8, %s6
  $region1: #{dueling_dqn_forward.1} parent=0
    #allocation2 [shape = 'u8[32768]{0}', space=vmem, size = 0x8000, scoped, tag = 'input window, operand 1, single buffered']
    #allocation3 [shape = 's32[1]{0}', space=sflag, size = 0x4, scoped, tag = 'scoped memory for dueling_dqn_forward.1']
    #allocation4 [shape = 'u8[262144]{0}', space=vmem, size = 0x40000, scoped, tag = 'input window, operand 2, single buffered']
    #allocation5 [shape = 's32[1]{0}', space=sflag, size = 0x4, scoped, tag = 'scoped memory for dueling_dqn_forward.1']
    #allocation6 [shape = 'u8[262144]{0}', space=vmem, size = 0x40000, scoped, tag = 'input window, operand 3, single buffered']
    %10 = vsyncpa [#allocation3], 0
    %11 = vsyncpa [#allocation5], 0
    // Predicated region
    $region2: #{dueling_dqn_forward.1} parent=1 // pred_check
      _
    $region3: #{dueling_dqn_forward.1} parent=1 // pred_check_branch
      %13 = sbr.rel (0) target = $region5
    $region4: #{dueling_dqn_forward.1} parent=1 // pred_region
      _
    $region5: #{dueling_dqn_forward.1} parent=1 // pred_fallthru
      _
    // Predicated region
    $region6: #{dueling_dqn_forward.1} parent=1 // pred_check
      _
    $region7: #{dueling_dqn_forward.1} parent=1 // pred_check_branch
      %15 = sbr.rel (0) target = $region9
    $region8: #{dueling_dqn_forward.1} parent=1 // pred_region
      %s17 = ssub.s32 1024, 1024
      %18 = vsyncadd [#allocation3], %s17
      %s19 = sshll.u32 [#allocation2], 4
      %s20 = int_to_ptr.vmem [resolvable:$true] %s19
      %25 = dma.hbm_to_vmem [thread:$0]  %s1, 1024, %s20, [#allocation3], 64, 64, 4
    $region9: #{dueling_dqn_forward.1} parent=1 // pred_fallthru
      _
    // Predicated region
    $region10: #{dueling_dqn_forward.1} parent=1 // pred_check
      _
    $region11: #{dueling_dqn_forward.1} parent=1 // pred_check_branch
      %27 = sbr.rel (0) target = $region13
    $region12: #{dueling_dqn_forward.1} parent=1 // pred_region
      %s29 = ssub.s32 8192, 8192
      %30 = vsyncadd [#allocation5], %s29
      %s31 = sshll.u32 [#allocation4], 4
      %s32 = int_to_ptr.vmem [resolvable:$true] %s31
      %37 = dma.hbm_to_vmem [thread:$0]  %s2, 8192, %s32, [#allocation5], 512, 512, 32
    $region13: #{dueling_dqn_forward.1} parent=1 // pred_fallthru
      _
    // Predicated region
    $region14: #{dueling_dqn_forward.1} parent=1 // pred_check
      _
    $region15: #{dueling_dqn_forward.1} parent=1 // pred_check_branch
      %39 = sbr.rel (0) target = $region17
    $region16: #{dueling_dqn_forward.1} parent=1 // pred_region
      %s41 = ssub.s32 8192, 8192
      %42 = vsyncadd [#allocation5], %s41
      %s43 = sshll.u32 [#allocation6], 4
      %s44 = int_to_ptr.vmem [resolvable:$true] %s43
      %49 = dma.hbm_to_vmem [thread:$0]  %s3, 8192, %s44, [#allocation5], 64, 64, 4
    $region17: #{dueling_dqn_forward.1} parent=1 // pred_fallthru
      _
    // Predicated region
    $region18: #{dueling_dqn_forward.1} parent=1 // pred_check
      _
    $region19: #{dueling_dqn_forward.1} parent=1 // pred_check_branch
      %51 = sbr.rel (0) target = $region21
    $region20: #{dueling_dqn_forward.1} parent=1 // pred_region
      _
    $region21: #{dueling_dqn_forward.1} parent=1 // pred_fallthru
      _
    // Predicated region
    $region22: #{dueling_dqn_forward.1} parent=1 // pred_check
      _
    $region23: #{dueling_dqn_forward.1} parent=1 // pred_check_branch
      %53 = sbr.rel (0) target = $region25
    $region24: #{dueling_dqn_forward.1} parent=1 // pred_region
      %54 = dma.done [#allocation3], 1024
    $region25: #{dueling_dqn_forward.1} parent=1 // pred_fallthru
      _
    // Predicated region
    $region26: #{dueling_dqn_forward.1} parent=1 // pred_check
      _
    $region27: #{dueling_dqn_forward.1} parent=1 // pred_check_branch
      %56 = sbr.rel (0) target = $region29
    $region28: #{dueling_dqn_forward.1} parent=1 // pred_region
      %57 = dma.done [#allocation5], 8192
    $region29: #{dueling_dqn_forward.1} parent=1 // pred_fallthru
      _
    // Predicated region
    $region30: #{dueling_dqn_forward.1} parent=1 // pred_check
      _
    $region31: #{dueling_dqn_forward.1} parent=1 // pred_check_branch
      %59 = sbr.rel (0) target = $region33
    $region32: #{dueling_dqn_forward.1} parent=1 // pred_region
      %60 = dma.done [#allocation5], 8192
    $region33: #{dueling_dqn_forward.1} parent=1 // pred_fallthru
      _
    %v62 = vld [vmem:[%s4] sm:$0x1]
    %v63 = vld [vmem:[%s4 + $0x1] sm:$0xff]
    %v64 = vld [vmem:[%s4 + $0x9] sm:$0x1]
    %v65 = vld [vmem:[%s0] sm:$0xf]
    %v66 = vld [vmem:[%s0 + $0x4] sm:$0xf]
    %v67 = vld [vmem:[#allocation2] sm:$0xf]
    %v68 = vld [vmem:[#allocation2 + $0x4] sm:$0xf]
    %v69 = vld [vmem:[#allocation2 + $0x8] sm:$0xf]
    %v70 = vld [vmem:[#allocation2 + $0xc] sm:$0xf]
    %v71 = vld [vmem:[#allocation2 + $0x10] sm:$0xf]
    %v72 = vld [vmem:[#allocation2 + $0x14] sm:$0xf]
    %v73 = vld [vmem:[#allocation2 + $0x18] sm:$0xf]
    %v74 = vld [vmem:[#allocation2 + $0x1c] sm:$0xf]
    %v75 = vld [vmem:[#allocation2 + $0x20] sm:$0xf]
    %v76 = vld [vmem:[#allocation2 + $0x24] sm:$0xf]
    %v77 = vld [vmem:[#allocation2 + $0x28] sm:$0xf]
    %v78 = vld [vmem:[#allocation2 + $0x2c] sm:$0xf]
    %v79 = vld [vmem:[#allocation2 + $0x30] sm:$0xf]
    %v80 = vld [vmem:[#allocation2 + $0x34] sm:$0xf]
    %v81 = vld [vmem:[#allocation2 + $0x38] sm:$0xf]
    %v82 = vld [vmem:[#allocation2 + $0x3c] sm:$0xf]
    %v84 = vlaneseq
    %v85 = vshrl.u32 %v84, 7
    %v86 = vsub.s32 0, %v85
    %v87 = vrot.slane %v62, %v86
    %v91 = vunpack.c.l.b16 %v65
    %v92 = vunpack.c.l.b16 %v66
    %v93 = vpack.c.b16 %v92, %v91
    %v111 = vunpack.c.l.b16 %v67
    %v112 = vunpack.c.l.b16 %v68
    %v113 = vunpack.c.l.b16 %v69
    %v114 = vunpack.c.l.b16 %v70
    %v115 = vunpack.c.l.b16 %v71
    %v116 = vunpack.c.l.b16 %v72
    %v117 = vunpack.c.l.b16 %v73
    %v118 = vunpack.c.l.b16 %v74
    %v119 = vunpack.c.l.b16 %v75
    %v120 = vunpack.c.l.b16 %v76
    %v121 = vunpack.c.l.b16 %v77
    %v122 = vunpack.c.l.b16 %v78
    %v123 = vunpack.c.l.b16 %v79
    %v124 = vunpack.c.l.b16 %v80
    %v125 = vunpack.c.l.b16 %v81
    %v126 = vunpack.c.l.b16 %v82
    %v127 = vpack.c.b16 %v112, %v111
    %v128 = vpack.c.b16 %v114, %v113
    %v129 = vpack.c.b16 %v116, %v115
    %v130 = vpack.c.b16 %v118, %v117
    %v131 = vpack.c.b16 %v120, %v119
    %v132 = vpack.c.b16 %v122, %v121
    %v133 = vpack.c.b16 %v124, %v123
    %v134 = vpack.c.b16 %v126, %v125
    %143 = vmatprep.subr.bf16.mxu0 0
    %144 = vmatpush1.bf16.msra.mxu0 %v127
    %145 = vmatprep.subr.bf16.mxu0 0
    %146 = vmatpush1.bf16.msra.mxu0 %v128
    %147 = vmatprep.subr.bf16.mxu0 0
    %148 = vmatpush1.bf16.msra.mxu0 %v129
    %149 = vmatprep.subr.bf16.mxu0 0
    %150 = vmatpush1.bf16.msra.mxu0 %v130
    %151 = vmatprep.subr.bf16.mxu0 0
    %152 = vmatpush1.bf16.msra.mxu0 %v131
    %153 = vmatprep.subr.bf16.mxu0 0
    %154 = vmatpush1.bf16.msra.mxu0 %v132
    %155 = vmatprep.subr.bf16.mxu0 0
    %156 = vmatpush1.bf16.msra.mxu0 %v133
    %157 = vmatprep.subr.bf16.mxu0 0
    %158 = vmatpush1.bf16.msra.mxu0 %v134
    %159 = vmatprep.subr.bf16.mxu0 0
    %160 = vmatpush1.bf16.msra.mxu0 0
    %161 = vmatprep.subr.bf16.mxu0 0
    %162 = vmatpush1.bf16.msra.mxu0 0
    %163 = vmatprep.subr.bf16.mxu0 0
    %164 = vmatpush1.bf16.msra.mxu0 0
    %165 = vmatprep.subr.bf16.mxu0 0
    %166 = vmatpush1.bf16.msra.mxu0 0
    %167 = vmatprep.subr.bf16.mxu0 0
    %168 = vmatpush1.bf16.msra.mxu0 0
    %169 = vmatprep.subr.bf16.mxu0 0
    %170 = vmatpush1.bf16.msra.mxu0 0
    %171 = vmatprep.subr.bf16.mxu0 0
    %172 = vmatpush1.bf16.msra.mxu0 0
    %173 = vmatprep.subr.bf16.mxu0 0
    %174 = vmatpush1.bf16.msra.mxu0 0
    %175 = vmatprep.mubr.bf16.mxu0 0
    %176 = vmatmul.mubr.bf16.gmra.mrb[0].mxu0 %v93
    %v177 = vpop.f32.mrb[0].mxu0
    %v178 = vadd.f32 %v87, %v177
    %v179 = vpop.f32.mrb[0].mxu0
    %v180 = vpop.f32.mrb[0].mxu0
    %v181 = vadd.f32 %v87, %v180
    %v182 = vpop.f32.mrb[0].mxu0
    %183 = vdwg.mxu0
    %v184 = vmax.f32 %v178, 0.0
    %v185 = vmax.f32 %v181, 0.0
    %v186 = vpack.c.bf16 %v185, %v184
    %v187 = vld [vmem:[#allocation4] sm:$0xff]
    %v188 = vld [vmem:[#allocation4 + $0x8] sm:$0xff]
    %v189 = vld [vmem:[#allocation4 + $0x10] sm:$0xff]
    %v190 = vld [vmem:[#allocation4 + $0x18] sm:$0xff]
    %v191 = vld [vmem:[#allocation4 + $0x20] sm:$0xff]
    %v192 = vld [vmem:[#allocation4 + $0x28] sm:$0xff]
    %v193 = vld [vmem:[#allocation4 + $0x30] sm:$0xff]
    %v194 = vld [vmem:[#allocation4 + $0x38] sm:$0xff]
    %v195 = vld [vmem:[#allocation4 + $0x40] sm:$0xff]
    %v196 = vld [vmem:[#allocation4 + $0x48] sm:$0xff]
    %v197 = vld [vmem:[#allocation4 + $0x50] sm:$0xff]
    %v198 = vld [vmem:[#allocation4 + $0x58] sm:$0xff]
    %v199 = vld [vmem:[#allocation4 + $0x60] sm:$0xff]
    %v200 = vld [vmem:[#allocation4 + $0x68] sm:$0xff]
    %v201 = vld [vmem:[#allocation4 + $0x70] sm:$0xff]
    %v202 = vld [vmem:[#allocation4 + $0x78] sm:$0xff]
    %v203 = vld [vmem:[#allocation4 + $0x80] sm:$0xff]
    %v204 = vld [vmem:[#allocation4 + $0x88] sm:$0xff]
    %v205 = vld [vmem:[#allocation4 + $0x90] sm:$0xff]
    %v206 = vld [vmem:[#allocation4 + $0x98] sm:$0xff]
    %v207 = vld [vmem:[#allocation4 + $0xa0] sm:$0xff]
    %v208 = vld [vmem:[#allocation4 + $0xa8] sm:$0xff]
    %v209 = vld [vmem:[#allocation4 + $0xb0] sm:$0xff]
    %v210 = vld [vmem:[#allocation4 + $0xb8] sm:$0xff]
    %v211 = vld [vmem:[#allocation4 + $0xc0] sm:$0xff]
    %v212 = vld [vmem:[#allocation4 + $0xc8] sm:$0xff]
    %v213 = vld [vmem:[#allocation4 + $0xd0] sm:$0xff]
    %v214 = vld [vmem:[#allocation4 + $0xd8] sm:$0xff]
    %v215 = vld [vmem:[#allocation4 + $0xe0] sm:$0xff]
    %v216 = vld [vmem:[#allocation4 + $0xe8] sm:$0xff]
    %v217 = vld [vmem:[#allocation4 + $0xf0] sm:$0xff]
    %v218 = vld [vmem:[#allocation4 + $0xf8] sm:$0xff]
    %v219 = vld [vmem:[#allocation4 + $0x100] sm:$0xff]
    %v220 = vld [vmem:[#allocation4 + $0x108] sm:$0xff]
    %v221 = vld [vmem:[#allocation4 + $0x110] sm:$0xff]
    %v222 = vld [vmem:[#allocation4 + $0x118] sm:$0xff]
    %v223 = vld [vmem:[#allocation4 + $0x120] sm:$0xff]
    %v224 = vld [vmem:[#allocation4 + $0x128] sm:$0xff]
    %v225 = vld [vmem:[#allocation4 + $0x130] sm:$0xff]
    %v226 = vld [vmem:[#allocation4 + $0x138] sm:$0xff]
    %v227 = vld [vmem:[#allocation4 + $0x140] sm:$0xff]
    %v228 = vld [vmem:[#allocation4 + $0x148] sm:$0xff]
    %v229 = vld [vmem:[#allocation4 + $0x150] sm:$0xff]
    %v230 = vld [vmem:[#allocation4 + $0x158] sm:$0xff]
    %v231 = vld [vmem:[#allocation4 + $0x160] sm:$0xff]
    %v232 = vld [vmem:[#allocation4 + $0x168] sm:$0xff]
    %v233 = vld [vmem:[#allocation4 + $0x170] sm:$0xff]
    %v234 = vld [vmem:[#allocation4 + $0x178] sm:$0xff]
    %v235 = vld [vmem:[#allocation4 + $0x180] sm:$0xff]
    %v236 = vld [vmem:[#allocation4 + $0x188] sm:$0xff]
    %v237 = vld [vmem:[#allocation4 + $0x190] sm:$0xff]
    %v238 = vld [vmem:[#allocation4 + $0x198] sm:$0xff]
    %v239 = vld [vmem:[#allocation4 + $0x1a0] sm:$0xff]
    %v240 = vld [vmem:[#allocation4 + $0x1a8] sm:$0xff]
    %v241 = vld [vmem:[#allocation4 + $0x1b0] sm:$0xff]
    %v242 = vld [vmem:[#allocation4 + $0x1b8] sm:$0xff]
    %v243 = vld [vmem:[#allocation4 + $0x1c0] sm:$0xff]
    %v244 = vld [vmem:[#allocation4 + $0x1c8] sm:$0xff]
    %v245 = vld [vmem:[#allocation4 + $0x1d0] sm:$0xff]
    %v246 = vld [vmem:[#allocation4 + $0x1d8] sm:$0xff]
    %v247 = vld [vmem:[#allocation4 + $0x1e0] sm:$0xff]
    %v248 = vld [vmem:[#allocation4 + $0x1e8] sm:$0xff]
    %v249 = vld [vmem:[#allocation4 + $0x1f0] sm:$0xff]
    %v250 = vld [vmem:[#allocation4 + $0x1f8] sm:$0xff]
    %v252 = vlaneseq
    %v253 = vshrl.u32 %v252, 7
    %v254 = vsub.s32 0, %v253
    %v255 = vrot.slane %v63, %v254
    %v256 = vlaneseq
    %v257 = vshrl.u32 %v256, 7
    %v258 = vsub.s32 1, %v257
    %v259 = vrot.slane %v63, %v258
    %v260 = vlaneseq
    %v261 = vshrl.u32 %v260, 7
    %v262 = vsub.s32 2, %v261
    %v263 = vrot.slane %v63, %v262
    %v264 = vlaneseq
    %v265 = vshrl.u32 %v264, 7
    %v266 = vsub.s32 3, %v265
    %v267 = vrot.slane %v63, %v266
    %v268 = vlaneseq
    %v269 = vshrl.u32 %v268, 7
    %v270 = vsub.s32 4, %v269
    %v271 = vrot.slane %v63, %v270
    %v272 = vlaneseq
    %v273 = vshrl.u32 %v272, 7
    %v274 = vsub.s32 5, %v273
    %v275 = vrot.slane %v63, %v274
    %v276 = vlaneseq
    %v277 = vshrl.u32 %v276, 7
    %v278 = vsub.s32 6, %v277
    %v279 = vrot.slane %v63, %v278
    %v280 = vlaneseq
    %v281 = vshrl.u32 %v280, 7
    %v282 = vsub.s32 7, %v281
    %v283 = vrot.slane %v63, %v282
    %v356 = vunpack.c.l.b16 %v187
    %v357 = vunpack.c.h.b16 %v187
    %v358 = vunpack.c.l.b16 %v188
    %v359 = vunpack.c.h.b16 %v188
    %v360 = vunpack.c.l.b16 %v189
    %v361 = vunpack.c.h.b16 %v189
    %v362 = vunpack.c.l.b16 %v190
    %v363 = vunpack.c.h.b16 %v190
    %v364 = vunpack.c.l.b16 %v191
    %v365 = vunpack.c.h.b16 %v191
    %v366 = vunpack.c.l.b16 %v192
    %v367 = vunpack.c.h.b16 %v192
    %v368 = vunpack.c.l.b16 %v193
    %v369 = vunpack.c.h.b16 %v193
    %v370 = vunpack.c.l.b16 %v194
    %v371 = vunpack.c.h.b16 %v194
    %v372 = vunpack.c.l.b16 %v195
    %v373 = vunpack.c.h.b16 %v195
    %v374 = vunpack.c.l.b16 %v196
    %v375 = vunpack.c.h.b16 %v196
    %v376 = vunpack.c.l.b16 %v197
    %v377 = vunpack.c.h.b16 %v197
    %v378 = vunpack.c.l.b16 %v198
    %v379 = vunpack.c.h.b16 %v198
    %v380 = vunpack.c.l.b16 %v199
    %v381 = vunpack.c.h.b16 %v199
    %v382 = vunpack.c.l.b16 %v200
    %v383 = vunpack.c.h.b16 %v200
    %v384 = vunpack.c.l.b16 %v201
    %v385 = vunpack.c.h.b16 %v201
    %v386 = vunpack.c.l.b16 %v202
    %v387 = vunpack.c.h.b16 %v202
    %v388 = vunpack.c.l.b16 %v203
    %v389 = vunpack.c.h.b16 %v203
    %v390 = vunpack.c.l.b16 %v204
    %v391 = vunpack.c.h.b16 %v204
    %v392 = vunpack.c.l.b16 %v205
    %v393 = vunpack.c.h.b16 %v205
    %v394 = vunpack.c.l.b16 %v206
    %v395 = vunpack.c.h.b16 %v206
    %v396 = vunpack.c.l.b16 %v207
    %v397 = vunpack.c.h.b16 %v207
    %v398 = vunpack.c.l.b16 %v208
    %v399 = vunpack.c.h.b16 %v208
    %v400 = vunpack.c.l.b16 %v209
    %v401 = vunpack.c.h.b16 %v209
    %v402 = vunpack.c.l.b16 %v210
    %v403 = vunpack.c.h.b16 %v210
    %v404 = vunpack.c.l.b16 %v211
    %v405 = vunpack.c.h.b16 %v211
    %v406 = vunpack.c.l.b16 %v212
    %v407 = vunpack.c.h.b16 %v212
    %v408 = vunpack.c.l.b16 %v213
    %v409 = vunpack.c.h.b16 %v213
    %v410 = vunpack.c.l.b16 %v214
    %v411 = vunpack.c.h.b16 %v214
    %v412 = vunpack.c.l.b16 %v215
    %v413 = vunpack.c.h.b16 %v215
    %v414 = vunpack.c.l.b16 %v216
    %v415 = vunpack.c.h.b16 %v216
    %v416 = vunpack.c.l.b16 %v217
    %v417 = vunpack.c.h.b16 %v217
    %v418 = vunpack.c.l.b16 %v218
    %v419 = vunpack.c.h.b16 %v218
    %v420 = vunpack.c.l.b16 %v219
    %v421 = vunpack.c.h.b16 %v219
    %v422 = vunpack.c.l.b16 %v220
    %v423 = vunpack.c.h.b16 %v220
    %v424 = vunpack.c.l.b16 %v221
    %v425 = vunpack.c.h.b16 %v221
    %v426 = vunpack.c.l.b16 %v222
    %v427 = vunpack.c.h.b16 %v222
    %v428 = vunpack.c.l.b16 %v223
    %v429 = vunpack.c.h.b16 %v223
    %v430 = vunpack.c.l.b16 %v224
    %v431 = vunpack.c.h.b16 %v224
    %v432 = vunpack.c.l.b16 %v225
    %v433 = vunpack.c.h.b16 %v225
    %v434 = vunpack.c.l.b16 %v226
    %v435 = vunpack.c.h.b16 %v226
    %v436 = vunpack.c.l.b16 %v227
    %v437 = vunpack.c.h.b16 %v227
    %v438 = vunpack.c.l.b16 %v228
    %v439 = vunpack.c.h.b16 %v228
    %v440 = vunpack.c.l.b16 %v229
    %v441 = vunpack.c.h.b16 %v229
    %v442 = vunpack.c.l.b16 %v230
    %v443 = vunpack.c.h.b16 %v230
    %v444 = vunpack.c.l.b16 %v231
    %v445 = vunpack.c.h.b16 %v231
    %v446 = vunpack.c.l.b16 %v232
    %v447 = vunpack.c.h.b16 %v232
    %v448 = vunpack.c.l.b16 %v233
    %v449 = vunpack.c.h.b16 %v233
    %v450 = vunpack.c.l.b16 %v234
    %v451 = vunpack.c.h.b16 %v234
    %v452 = vunpack.c.l.b16 %v235
    %v453 = vunpack.c.h.b16 %v235
    %v454 = vunpack.c.l.b16 %v236
    %v455 = vunpack.c.h.b16 %v236
    %v456 = vunpack.c.l.b16 %v237
    %v457 = vunpack.c.h.b16 %v237
    %v458 = vunpack.c.l.b16 %v238
    %v459 = vunpack.c.h.b16 %v238
    %v460 = vunpack.c.l.b16 %v239
    %v461 = vunpack.c.h.b16 %v239
    %v462 = vunpack.c.l.b16 %v240
    %v463 = vunpack.c.h.b16 %v240
    %v464 = vunpack.c.l.b16 %v241
    %v465 = vunpack.c.h.b16 %v241
    %v466 = vunpack.c.l.b16 %v242
    %v467 = vunpack.c.h.b16 %v242
    %v468 = vunpack.c.l.b16 %v243
    %v469 = vunpack.c.h.b16 %v243
    %v470 = vunpack.c.l.b16 %v244
    %v471 = vunpack.c.h.b16 %v244
    %v472 = vunpack.c.l.b16 %v245
    %v473 = vunpack.c.h.b16 %v245
    %v474 = vunpack.c.l.b16 %v246
    %v475 = vunpack.c.h.b16 %v246
    %v476 = vunpack.c.l.b16 %v247
    %v477 = vunpack.c.h.b16 %v247
    %v478 = vunpack.c.l.b16 %v248
    %v479 = vunpack.c.h.b16 %v248
    %v480 = vunpack.c.l.b16 %v249
    %v481 = vunpack.c.h.b16 %v249
    %v482 = vunpack.c.l.b16 %v250
    %v483 = vunpack.c.h.b16 %v250
    %v484 = vpack.c.b16 %v364, %v356
    %v485 = vpack.c.b16 %v365, %v357
    %v486 = vpack.c.b16 %v366, %v358
    %v487 = vpack.c.b16 %v367, %v359
    %v488 = vpack.c.b16 %v368, %v360
    %v489 = vpack.c.b16 %v369, %v361
    %v490 = vpack.c.b16 %v370, %v362
    %v491 = vpack.c.b16 %v371, %v363
    %v492 = vpack.c.b16 %v380, %v372
    %v493 = vpack.c.b16 %v381, %v373
    %v494 = vpack.c.b16 %v382, %v374
    %v495 = vpack.c.b16 %v383, %v375
    %v496 = vpack.c.b16 %v384, %v376
    %v497 = vpack.c.b16 %v385, %v377
    %v498 = vpack.c.b16 %v386, %v378
    %v499 = vpack.c.b16 %v387, %v379
    %v500 = vpack.c.b16 %v396, %v388
    %v501 = vpack.c.b16 %v397, %v389
    %v502 = vpack.c.b16 %v398, %v390
    %v503 = vpack.c.b16 %v399, %v391
    %v504 = vpack.c.b16 %v400, %v392
    %v505 = vpack.c.b16 %v401, %v393
    %v506 = vpack.c.b16 %v402, %v394
    %v507 = vpack.c.b16 %v403, %v395
    %v508 = vpack.c.b16 %v412, %v404
    %v509 = vpack.c.b16 %v413, %v405
    %v510 = vpack.c.b16 %v414, %v406
    %v511 = vpack.c.b16 %v415, %v407
    %v512 = vpack.c.b16 %v416, %v408
    %v513 = vpack.c.b16 %v417, %v409
    %v514 = vpack.c.b16 %v418, %v410
    %v515 = vpack.c.b16 %v419, %v411
    %v516 = vpack.c.b16 %v428, %v420
    %v517 = vpack.c.b16 %v429, %v421
    %v518 = vpack.c.b16 %v430, %v422
    %v519 = vpack.c.b16 %v431, %v423
    %v520 = vpack.c.b16 %v432, %v424
    %v521 = vpack.c.b16 %v433, %v425
    %v522 = vpack.c.b16 %v434, %v426
    %v523 = vpack.c.b16 %v435, %v427
    %v524 = vpack.c.b16 %v444, %v436
    %v525 = vpack.c.b16 %v445, %v437
    %v526 = vpack.c.b16 %v446, %v438
    %v527 = vpack.c.b16 %v447, %v439
    %v528 = vpack.c.b16 %v448, %v440
    %v529 = vpack.c.b16 %v449, %v441
    %v530 = vpack.c.b16 %v450, %v442
    %v531 = vpack.c.b16 %v451, %v443
    %v532 = vpack.c.b16 %v460, %v452
    %v533 = vpack.c.b16 %v461, %v453
    %v534 = vpack.c.b16 %v462, %v454
    %v535 = vpack.c.b16 %v463, %v455
    %v536 = vpack.c.b16 %v464, %v456
    %v537 = vpack.c.b16 %v465, %v457
    %v538 = vpack.c.b16 %v466, %v458
    %v539 = vpack.c.b16 %v467, %v459
    %v540 = vpack.c.b16 %v476, %v468
    %v541 = vpack.c.b16 %v477, %v469
    %v542 = vpack.c.b16 %v478, %v470
    %v543 = vpack.c.b16 %v479, %v471
    %v544 = vpack.c.b16 %v480, %v472
    %v545 = vpack.c.b16 %v481, %v473
    %v546 = vpack.c.b16 %v482, %v474
    %v547 = vpack.c.b16 %v483, %v475
    %612 = vmatprep.subr.bf16.mxu0 %v485
    %613 = vmatpush1.bf16.msra.mxu0 %v484
    %614 = vmatprep.subr.bf16.mxu0 %v493
    %615 = vmatpush1.bf16.msra.mxu0 %v492
    %616 = vmatprep.subr.bf16.mxu0 %v501
    %617 = vmatpush1.bf16.msra.mxu0 %v500
    %618 = vmatprep.subr.bf16.mxu0 %v509
    %619 = vmatpush1.bf16.msra.mxu0 %v508
    %620 = vmatprep.subr.bf16.mxu0 %v517
    %621 = vmatpush1.bf16.msra.mxu0 %v516
    %622 = vmatprep.subr.bf16.mxu0 %v525
    %623 = vmatpush1.bf16.msra.mxu0 %v524
    %624 = vmatprep.subr.bf16.mxu0 %v533
    %625 = vmatpush1.bf16.msra.mxu0 %v532
    %626 = vmatprep.subr.bf16.mxu0 %v541
    %627 = vmatpush1.bf16.msra.mxu0 %v540
    %628 = vmatprep.subr.bf16.mxu0 0
    %629 = vmatpush1.bf16.msra.mxu0 0
    %630 = vmatprep.subr.bf16.mxu0 0
    %631 = vmatpush1.bf16.msra.mxu0 0
    %632 = vmatprep.subr.bf16.mxu0 0
    %633 = vmatpush1.bf16.msra.mxu0 0
    %634 = vmatprep.subr.bf16.mxu0 0
    %635 = vmatpush1.bf16.msra.mxu0 0
    %636 = vmatprep.subr.bf16.mxu0 0
    %637 = vmatpush1.bf16.msra.mxu0 0
    %638 = vmatprep.subr.bf16.mxu0 0
    %639 = vmatpush1.bf16.msra.mxu0 0
    %640 = vmatprep.subr.bf16.mxu0 0
    %641 = vmatpush1.bf16.msra.mxu0 0
    %642 = vmatprep.subr.bf16.mxu0 0
    %643 = vmatpush1.bf16.msra.mxu0 0
    %644 = vmatprep.mubr.bf16.mxu0 0
    %645 = vmatmul.mubr.bf16.gmra.mrb[0].mxu0 %v186
    %v646 = vpop.f32.mrb[0].mxu0
    %v647 = vadd.f32 %v255, %v646
    %v648 = vpop.f32.mrb[0].mxu0
    %v649 = vadd.f32 %v259, %v648
    %v650 = vpop.f32.mrb[0].mxu0
    %v651 = vadd.f32 %v255, %v650
    %v652 = vpop.f32.mrb[0].mxu0
    %v653 = vadd.f32 %v259, %v652
    %654 = vdwg.mxu0
    %655 = vmatprep.subr.bf16.mxu0 %v487
    %656 = vmatpush1.bf16.msra.mxu0 %v486
    %657 = vmatprep.subr.bf16.mxu0 %v495
    %658 = vmatpush1.bf16.msra.mxu0 %v494
    %659 = vmatprep.subr.bf16.mxu0 %v503
    %660 = vmatpush1.bf16.msra.mxu0 %v502
    %661 = vmatprep.subr.bf16.mxu0 %v511
    %662 = vmatpush1.bf16.msra.mxu0 %v510
    %663 = vmatprep.subr.bf16.mxu0 %v519
    %664 = vmatpush1.bf16.msra.mxu0 %v518
    %665 = vmatprep.subr.bf16.mxu0 %v527
    %666 = vmatpush1.bf16.msra.mxu0 %v526
    %667 = vmatprep.subr.bf16.mxu0 %v535
    %668 = vmatpush1.bf16.msra.mxu0 %v534
    %669 = vmatprep.subr.bf16.mxu0 %v543
    %670 = vmatpush1.bf16.msra.mxu0 %v542
    %671 = vmatprep.subr.bf16.mxu0 0
    %672 = vmatpush1.bf16.msra.mxu0 0
    %673 = vmatprep.subr.bf16.mxu0 0
    %674 = vmatpush1.bf16.msra.mxu0 0
    %675 = vmatprep.subr.bf16.mxu0 0
    %676 = vmatpush1.bf16.msra.mxu0 0
    %677 = vmatprep.subr.bf16.mxu0 0
    %678 = vmatpush1.bf16.msra.mxu0 0
    %679 = vmatprep.subr.bf16.mxu0 0
    %680 = vmatpush1.bf16.msra.mxu0 0
    %681 = vmatprep.subr.bf16.mxu0 0
    %682 = vmatpush1.bf16.msra.mxu0 0
    %683 = vmatprep.subr.bf16.mxu0 0
    %684 = vmatpush1.bf16.msra.mxu0 0
    %685 = vmatprep.subr.bf16.mxu0 0
    %686 = vmatpush1.bf16.msra.mxu0 0
    %687 = vmatprep.mubr.bf16.mxu0 0
    %688 = vmatmul.mubr.bf16.gmra.mrb[0].mxu0 %v186
    %v689 = vpop.f32.mrb[0].mxu0
    %v690 = vadd.f32 %v263, %v689
    %v691 = vpop.f32.mrb[0].mxu0
    %v692 = vadd.f32 %v267, %v691
    %v693 = vpop.f32.mrb[0].mxu0
    %v694 = vadd.f32 %v263, %v693
    %v695 = vpop.f32.mrb[0].mxu0
    %v696 = vadd.f32 %v267, %v695
    %697 = vdwg.mxu0
    %698 = vmatprep.subr.bf16.mxu0 %v489
    %699 = vmatpush1.bf16.msra.mxu0 %v488
    %700 = vmatprep.subr.bf16.mxu0 %v497
    %701 = vmatpush1.bf16.msra.mxu0 %v496
    %702 = vmatprep.subr.bf16.mxu0 %v505
    %703 = vmatpush1.bf16.msra.mxu0 %v504
    %704 = vmatprep.subr.bf16.mxu0 %v513
    %705 = vmatpush1.bf16.msra.mxu0 %v512
    %706 = vmatprep.subr.bf16.mxu0 %v521
    %707 = vmatpush1.bf16.msra.mxu0 %v520
    %708 = vmatprep.subr.bf16.mxu0 %v529
    %709 = vmatpush1.bf16.msra.mxu0 %v528
    %710 = vmatprep.subr.bf16.mxu0 %v537
    %711 = vmatpush1.bf16.msra.mxu0 %v536
    %712 = vmatprep.subr.bf16.mxu0 %v545
    %713 = vmatpush1.bf16.msra.mxu0 %v544
    %714 = vmatprep.subr.bf16.mxu0 0
    %715 = vmatpush1.bf16.msra.mxu0 0
    %716 = vmatprep.subr.bf16.mxu0 0
    %717 = vmatpush1.bf16.msra.mxu0 0
    %718 = vmatprep.subr.bf16.mxu0 0
    %719 = vmatpush1.bf16.msra.mxu0 0
    %720 = vmatprep.subr.bf16.mxu0 0
    %721 = vmatpush1.bf16.msra.mxu0 0
    %722 = vmatprep.subr.bf16.mxu0 0
    %723 = vmatpush1.bf16.msra.mxu0 0
    %724 = vmatprep.subr.bf16.mxu0 0
    %725 = vmatpush1.bf16.msra.mxu0 0
    %726 = vmatprep.subr.bf16.mxu0 0
    %727 = vmatpush1.bf16.msra.mxu0 0
    %728 = vmatprep.subr.bf16.mxu0 0
    %729 = vmatpush1.bf16.msra.mxu0 0
    %730 = vmatprep.mubr.bf16.mxu0 0
    %731 = vmatmul.mubr.bf16.gmra.mrb[0].mxu0 %v186
    %v732 = vpop.f32.mrb[0].mxu0
    %v733 = vadd.f32 %v271, %v732
    %v734 = vpop.f32.mrb[0].mxu0
    %v735 = vadd.f32 %v275, %v734
    %v736 = vpop.f32.mrb[0].mxu0
    %v737 = vadd.f32 %v271, %v736
    %v738 = vpop.f32.mrb[0].mxu0
    %v739 = vadd.f32 %v275, %v738
    %740 = vdwg.mxu0
    %741 = vmatprep.subr.bf16.mxu0 %v491
    %742 = vmatpush1.bf16.msra.mxu0 %v490
    %743 = vmatprep.subr.bf16.mxu0 %v499
    %744 = vmatpush1.bf16.msra.mxu0 %v498
    %745 = vmatprep.subr.bf16.mxu0 %v507
    %746 = vmatpush1.bf16.msra.mxu0 %v506
    %747 = vmatprep.subr.bf16.mxu0 %v515
    %748 = vmatpush1.bf16.msra.mxu0 %v514
    %749 = vmatprep.subr.bf16.mxu0 %v523
    %750 = vmatpush1.bf16.msra.mxu0 %v522
    %751 = vmatprep.subr.bf16.mxu0 %v531
    %752 = vmatpush1.bf16.msra.mxu0 %v530
    %753 = vmatprep.subr.bf16.mxu0 %v539
    %754 = vmatpush1.bf16.msra.mxu0 %v538
    %755 = vmatprep.subr.bf16.mxu0 %v547
    %756 = vmatpush1.bf16.msra.mxu0 %v546
    %757 = vmatprep.subr.bf16.mxu0 0
    %758 = vmatpush1.bf16.msra.mxu0 0
    %759 = vmatprep.subr.bf16.mxu0 0
    %760 = vmatpush1.bf16.msra.mxu0 0
    %761 = vmatprep.subr.bf16.mxu0 0
    %762 = vmatpush1.bf16.msra.mxu0 0
    %763 = vmatprep.subr.bf16.mxu0 0
    %764 = vmatpush1.bf16.msra.mxu0 0
    %765 = vmatprep.subr.bf16.mxu0 0
    %766 = vmatpush1.bf16.msra.mxu0 0
    %767 = vmatprep.subr.bf16.mxu0 0
    %768 = vmatpush1.bf16.msra.mxu0 0
    %769 = vmatprep.subr.bf16.mxu0 0
    %770 = vmatpush1.bf16.msra.mxu0 0
    %771 = vmatprep.subr.bf16.mxu0 0
    %772 = vmatpush1.bf16.msra.mxu0 0
    %773 = vmatprep.mubr.bf16.mxu0 0
    %774 = vmatmul.mubr.bf16.gmra.mrb[0].mxu0 %v186
    %v775 = vpop.f32.mrb[0].mxu0
    %v776 = vadd.f32 %v279, %v775
    %v777 = vpop.f32.mrb[0].mxu0
    %v778 = vadd.f32 %v283, %v777
    %v779 = vpop.f32.mrb[0].mxu0
    %v780 = vadd.f32 %v279, %v779
    %v781 = vpop.f32.mrb[0].mxu0
    %v782 = vadd.f32 %v283, %v781
    %783 = vdwg.mxu0
    %v784 = vmax.f32 %v647, 0.0
    %v785 = vmax.f32 %v649, 0.0
    %v786 = vmax.f32 %v690, 0.0
    %v787 = vmax.f32 %v692, 0.0
    %v788 = vmax.f32 %v733, 0.0
    %v789 = vmax.f32 %v735, 0.0
    %v790 = vmax.f32 %v776, 0.0
    %v791 = vmax.f32 %v778, 0.0
    %v792 = vmax.f32 %v651, 0.0
    %v793 = vmax.f32 %v653, 0.0
    %v794 = vmax.f32 %v694, 0.0
    %v795 = vmax.f32 %v696, 0.0
    %v796 = vmax.f32 %v737, 0.0
    %v797 = vmax.f32 %v739, 0.0
    %v798 = vmax.f32 %v780, 0.0
    %v799 = vmax.f32 %v782, 0.0
    %v800 = vpack.c.bf16 %v792, %v784
    %v801 = vpack.c.bf16 %v793, %v785
    %v802 = vpack.c.bf16 %v794, %v786
    %v803 = vpack.c.bf16 %v795, %v787
    %v804 = vpack.c.bf16 %v796, %v788
    %v805 = vpack.c.bf16 %v797, %v789
    %v806 = vpack.c.bf16 %v798, %v790
    %v807 = vpack.c.bf16 %v799, %v791
    %v808 = vld [vmem:[#allocation6] sm:$0xf]
    %v809 = vld [vmem:[#allocation6 + $0x4] sm:$0xf]
    %v810 = vld [vmem:[#allocation6 + $0x8] sm:$0xf]
    %v811 = vld [vmem:[#allocation6 + $0xc] sm:$0xf]
    %v812 = vld [vmem:[#allocation6 + $0x10] sm:$0xf]
    %v813 = vld [vmem:[#allocation6 + $0x14] sm:$0xf]
    %v814 = vld [vmem:[#allocation6 + $0x18] sm:$0xf]
    %v815 = vld [vmem:[#allocation6 + $0x1c] sm:$0xf]
    %v816 = vld [vmem:[#allocation6 + $0x20] sm:$0xf]
    %v817 = vld [vmem:[#allocation6 + $0x24] sm:$0xf]
    %v818 = vld [vmem:[#allocation6 + $0x28] sm:$0xf]
    %v819 = vld [vmem:[#allocation6 + $0x2c] sm:$0xf]
    %v820 = vld [vmem:[#allocation6 + $0x30] sm:$0xf]
    %v821 = vld [vmem:[#allocation6 + $0x34] sm:$0xf]
    %v822 = vld [vmem:[#allocation6 + $0x38] sm:$0xf]
    %v823 = vld [vmem:[#allocation6 + $0x3c] sm:$0xf]
    %v824 = vld [vmem:[#allocation6 + $0x40] sm:$0xf]
    %v825 = vld [vmem:[#allocation6 + $0x44] sm:$0xf]
    %v826 = vld [vmem:[#allocation6 + $0x48] sm:$0xf]
    %v827 = vld [vmem:[#allocation6 + $0x4c] sm:$0xf]
    %v828 = vld [vmem:[#allocation6 + $0x50] sm:$0xf]
    %v829 = vld [vmem:[#allocation6 + $0x54] sm:$0xf]
    %v830 = vld [vmem:[#allocation6 + $0x58] sm:$0xf]
    %v831 = vld [vmem:[#allocation6 + $0x5c] sm:$0xf]
    %v832 = vld [vmem:[#allocation6 + $0x60] sm:$0xf]
    %v833 = vld [vmem:[#allocation6 + $0x64] sm:$0xf]
    %v834 = vld [vmem:[#allocation6 + $0x68] sm:$0xf]
    %v835 = vld [vmem:[#allocation6 + $0x6c] sm:$0xf]
    %v836 = vld [vmem:[#allocation6 + $0x70] sm:$0xf]
    %v837 = vld [vmem:[#allocation6 + $0x74] sm:$0xf]
    %v838 = vld [vmem:[#allocation6 + $0x78] sm:$0xf]
    %v839 = vld [vmem:[#allocation6 + $0x7c] sm:$0xf]
    %v840 = vld [vmem:[#allocation6 + $0x80] sm:$0xf]
    %v841 = vld [vmem:[#allocation6 + $0x84] sm:$0xf]
    %v842 = vld [vmem:[#allocation6 + $0x88] sm:$0xf]
    %v843 = vld [vmem:[#allocation6 + $0x8c] sm:$0xf]
    %v844 = vld [vmem:[#allocation6 + $0x90] sm:$0xf]
    %v845 = vld [vmem:[#allocation6 + $0x94] sm:$0xf]
    %v846 = vld [vmem:[#allocation6 + $0x98] sm:$0xf]
    %v847 = vld [vmem:[#allocation6 + $0x9c] sm:$0xf]
    %v848 = vld [vmem:[#allocation6 + $0xa0] sm:$0xf]
    %v849 = vld [vmem:[#allocation6 + $0xa4] sm:$0xf]
    %v850 = vld [vmem:[#allocation6 + $0xa8] sm:$0xf]
    %v851 = vld [vmem:[#allocation6 + $0xac] sm:$0xf]
    %v852 = vld [vmem:[#allocation6 + $0xb0] sm:$0xf]
    %v853 = vld [vmem:[#allocation6 + $0xb4] sm:$0xf]
    %v854 = vld [vmem:[#allocation6 + $0xb8] sm:$0xf]
    %v855 = vld [vmem:[#allocation6 + $0xbc] sm:$0xf]
    %v856 = vld [vmem:[#allocation6 + $0xc0] sm:$0xf]
    %v857 = vld [vmem:[#allocation6 + $0xc4] sm:$0xf]
    %v858 = vld [vmem:[#allocation6 + $0xc8] sm:$0xf]
    %v859 = vld [vmem:[#allocation6 + $0xcc] sm:$0xf]
    %v860 = vld [vmem:[#allocation6 + $0xd0] sm:$0xf]
    %v861 = vld [vmem:[#allocation6 + $0xd4] sm:$0xf]
    %v862 = vld [vmem:[#allocation6 + $0xd8] sm:$0xf]
    %v863 = vld [vmem:[#allocation6 + $0xdc] sm:$0xf]
    %v864 = vld [vmem:[#allocation6 + $0xe0] sm:$0xf]
    %v865 = vld [vmem:[#allocation6 + $0xe4] sm:$0xf]
    %v866 = vld [vmem:[#allocation6 + $0xe8] sm:$0xf]
    %v867 = vld [vmem:[#allocation6 + $0xec] sm:$0xf]
    %v868 = vld [vmem:[#allocation6 + $0xf0] sm:$0xf]
    %v869 = vld [vmem:[#allocation6 + $0xf4] sm:$0xf]
    %v870 = vld [vmem:[#allocation6 + $0xf8] sm:$0xf]
    %v871 = vld [vmem:[#allocation6 + $0xfc] sm:$0xf]
    %v872 = vld [vmem:[#allocation6 + $0x100] sm:$0xf]
    %v873 = vld [vmem:[#allocation6 + $0x104] sm:$0xf]
    %v874 = vld [vmem:[#allocation6 + $0x108] sm:$0xf]
    %v875 = vld [vmem:[#allocation6 + $0x10c] sm:$0xf]
    %v876 = vld [vmem:[#allocation6 + $0x110] sm:$0xf]
    %v877 = vld [vmem:[#allocation6 + $0x114] sm:$0xf]
    %v878 = vld [vmem:[#allocation6 + $0x118] sm:$0xf]
    %v879 = vld [vmem:[#allocation6 + $0x11c] sm:$0xf]
    %v880 = vld [vmem:[#allocation6 + $0x120] sm:$0xf]
    %v881 = vld [vmem:[#allocation6 + $0x124] sm:$0xf]
    %v882 = vld [vmem:[#allocation6 + $0x128] sm:$0xf]
    %v883 = vld [vmem:[#allocation6 + $0x12c] sm:$0xf]
    %v884 = vld [vmem:[#allocation6 + $0x130] sm:$0xf]
    %v885 = vld [vmem:[#allocation6 + $0x134] sm:$0xf]
    %v886 = vld [vmem:[#allocation6 + $0x138] sm:$0xf]
    %v887 = vld [vmem:[#allocation6 + $0x13c] sm:$0xf]
    %v888 = vld [vmem:[#allocation6 + $0x140] sm:$0xf]
    %v889 = vld [vmem:[#allocation6 + $0x144] sm:$0xf]
    %v890 = vld [vmem:[#allocation6 + $0x148] sm:$0xf]
    %v891 = vld [vmem:[#allocation6 + $0x14c] sm:$0xf]
    %v892 = vld [vmem:[#allocation6 + $0x150] sm:$0xf]
    %v893 = vld [vmem:[#allocation6 + $0x154] sm:$0xf]
    %v894 = vld [vmem:[#allocation6 + $0x158] sm:$0xf]
    %v895 = vld [vmem:[#allocation6 + $0x15c] sm:$0xf]
    %v896 = vld [vmem:[#allocation6 + $0x160] sm:$0xf]
    %v897 = vld [vmem:[#allocation6 + $0x164] sm:$0xf]
    %v898 = vld [vmem:[#allocation6 + $0x168] sm:$0xf]
    %v899 = vld [vmem:[#allocation6 + $0x16c] sm:$0xf]
    %v900 = vld [vmem:[#allocation6 + $0x170] sm:$0xf]
    %v901 = vld [vmem:[#allocation6 + $0x174] sm:$0xf]
    %v902 = vld [vmem:[#allocation6 + $0x178] sm:$0xf]
    %v903 = vld [vmem:[#allocation6 + $0x17c] sm:$0xf]
    %v904 = vld [vmem:[#allocation6 + $0x180] sm:$0xf]
    %v905 = vld [vmem:[#allocation6 + $0x184] sm:$0xf]
    %v906 = vld [vmem:[#allocation6 + $0x188] sm:$0xf]
    %v907 = vld [vmem:[#allocation6 + $0x18c] sm:$0xf]
    %v908 = vld [vmem:[#allocation6 + $0x190] sm:$0xf]
    %v909 = vld [vmem:[#allocation6 + $0x194] sm:$0xf]
    %v910 = vld [vmem:[#allocation6 + $0x198] sm:$0xf]
    %v911 = vld [vmem:[#allocation6 + $0x19c] sm:$0xf]
    %v912 = vld [vmem:[#allocation6 + $0x1a0] sm:$0xf]
    %v913 = vld [vmem:[#allocation6 + $0x1a4] sm:$0xf]
    %v914 = vld [vmem:[#allocation6 + $0x1a8] sm:$0xf]
    %v915 = vld [vmem:[#allocation6 + $0x1ac] sm:$0xf]
    %v916 = vld [vmem:[#allocation6 + $0x1b0] sm:$0xf]
    %v917 = vld [vmem:[#allocation6 + $0x1b4] sm:$0xf]
    %v918 = vld [vmem:[#allocation6 + $0x1b8] sm:$0xf]
    %v919 = vld [vmem:[#allocation6 + $0x1bc] sm:$0xf]
    %v920 = vld [vmem:[#allocation6 + $0x1c0] sm:$0xf]
    %v921 = vld [vmem:[#allocation6 + $0x1c4] sm:$0xf]
    %v922 = vld [vmem:[#allocation6 + $0x1c8] sm:$0xf]
    %v923 = vld [vmem:[#allocation6 + $0x1cc] sm:$0xf]
    %v924 = vld [vmem:[#allocation6 + $0x1d0] sm:$0xf]
    %v925 = vld [vmem:[#allocation6 + $0x1d4] sm:$0xf]
    %v926 = vld [vmem:[#allocation6 + $0x1d8] sm:$0xf]
    %v927 = vld [vmem:[#allocation6 + $0x1dc] sm:$0xf]
    %v928 = vld [vmem:[#allocation6 + $0x1e0] sm:$0xf]
    %v929 = vld [vmem:[#allocation6 + $0x1e4] sm:$0xf]
    %v930 = vld [vmem:[#allocation6 + $0x1e8] sm:$0xf]
    %v931 = vld [vmem:[#allocation6 + $0x1ec] sm:$0xf]
    %v932 = vld [vmem:[#allocation6 + $0x1f0] sm:$0xf]
    %v933 = vld [vmem:[#allocation6 + $0x1f4] sm:$0xf]
    %v934 = vld [vmem:[#allocation6 + $0x1f8] sm:$0xf]
    %v935 = vld [vmem:[#allocation6 + $0x1fc] sm:$0xf]
    %v937 = vlaneseq
    %v938 = vshrl.u32 %v937, 7
    %v939 = vsub.s32 0, %v938
    %v940 = vrot.slane %v64, %v939
    %v1070 = vunpack.c.l.b16 %v808
    %v1071 = vunpack.c.l.b16 %v809
    %v1072 = vunpack.c.l.b16 %v810
    %v1073 = vunpack.c.l.b16 %v811
    %v1074 = vunpack.c.l.b16 %v812
    %v1075 = vunpack.c.l.b16 %v813
    %v1076 = vunpack.c.l.b16 %v814
    %v1077 = vunpack.c.l.b16 %v815
    %v1078 = vunpack.c.l.b16 %v816
    %v1079 = vunpack.c.l.b16 %v817
    %v1080 = vunpack.c.l.b16 %v818
    %v1081 = vunpack.c.l.b16 %v819
    %v1082 = vunpack.c.l.b16 %v820
    %v1083 = vunpack.c.l.b16 %v821
    %v1084 = vunpack.c.l.b16 %v822
    %v1085 = vunpack.c.l.b16 %v823
    %v1086 = vunpack.c.l.b16 %v824
    %v1087 = vunpack.c.l.b16 %v825
    %v1088 = vunpack.c.l.b16 %v826
    %v1089 = vunpack.c.l.b16 %v827
    %v1090 = vunpack.c.l.b16 %v828
    %v1091 = vunpack.c.l.b16 %v829
    %v1092 = vunpack.c.l.b16 %v830
    %v1093 = vunpack.c.l.b16 %v831
    %v1094 = vunpack.c.l.b16 %v832
    %v1095 = vunpack.c.l.b16 %v833
    %v1096 = vunpack.c.l.b16 %v834
    %v1097 = vunpack.c.l.b16 %v835
    %v1098 = vunpack.c.l.b16 %v836
    %v1099 = vunpack.c.l.b16 %v837
    %v1100 = vunpack.c.l.b16 %v838
    %v1101 = vunpack.c.l.b16 %v839
    %v1102 = vunpack.c.l.b16 %v840
    %v1103 = vunpack.c.l.b16 %v841
    %v1104 = vunpack.c.l.b16 %v842
    %v1105 = vunpack.c.l.b16 %v843
    %v1106 = vunpack.c.l.b16 %v844
    %v1107 = vunpack.c.l.b16 %v845
    %v1108 = vunpack.c.l.b16 %v846
    %v1109 = vunpack.c.l.b16 %v847
    %v1110 = vunpack.c.l.b16 %v848
    %v1111 = vunpack.c.l.b16 %v849
    %v1112 = vunpack.c.l.b16 %v850
    %v1113 = vunpack.c.l.b16 %v851
    %v1114 = vunpack.c.l.b16 %v852
    %v1115 = vunpack.c.l.b16 %v853
    %v1116 = vunpack.c.l.b16 %v854
    %v1117 = vunpack.c.l.b16 %v855
    %v1118 = vunpack.c.l.b16 %v856
    %v1119 = vunpack.c.l.b16 %v857
    %v1120 = vunpack.c.l.b16 %v858
    %v1121 = vunpack.c.l.b16 %v859
    %v1122 = vunpack.c.l.b16 %v860
    %v1123 = vunpack.c.l.b16 %v861
    %v1124 = vunpack.c.l.b16 %v862
    %v1125 = vunpack.c.l.b16 %v863
    %v1126 = vunpack.c.l.b16 %v864
    %v1127 = vunpack.c.l.b16 %v865
    %v1128 = vunpack.c.l.b16 %v866
    %v1129 = vunpack.c.l.b16 %v867
    %v1130 = vunpack.c.l.b16 %v868
    %v1131 = vunpack.c.l.b16 %v869
    %v1132 = vunpack.c.l.b16 %v870
    %v1133 = vunpack.c.l.b16 %v871
    %v1134 = vunpack.c.l.b16 %v872
    %v1135 = vunpack.c.l.b16 %v873
    %v1136 = vunpack.c.l.b16 %v874
    %v1137 = vunpack.c.l.b16 %v875
    %v1138 = vunpack.c.l.b16 %v876
    %v1139 = vunpack.c.l.b16 %v877
    %v1140 = vunpack.c.l.b16 %v878
    %v1141 = vunpack.c.l.b16 %v879
    %v1142 = vunpack.c.l.b16 %v880
    %v1143 = vunpack.c.l.b16 %v881
    %v1144 = vunpack.c.l.b16 %v882
    %v1145 = vunpack.c.l.b16 %v883
    %v1146 = vunpack.c.l.b16 %v884
    %v1147 = vunpack.c.l.b16 %v885
    %v1148 = vunpack.c.l.b16 %v886
    %v1149 = vunpack.c.l.b16 %v887
    %v1150 = vunpack.c.l.b16 %v888
    %v1151 = vunpack.c.l.b16 %v889
    %v1152 = vunpack.c.l.b16 %v890
    %v1153 = vunpack.c.l.b16 %v891
    %v1154 = vunpack.c.l.b16 %v892
    %v1155 = vunpack.c.l.b16 %v893
    %v1156 = vunpack.c.l.b16 %v894
    %v1157 = vunpack.c.l.b16 %v895
    %v1158 = vunpack.c.l.b16 %v896
    %v1159 = vunpack.c.l.b16 %v897
    %v1160 = vunpack.c.l.b16 %v898
    %v1161 = vunpack.c.l.b16 %v899
    %v1162 = vunpack.c.l.b16 %v900
    %v1163 = vunpack.c.l.b16 %v901
    %v1164 = vunpack.c.l.b16 %v902
    %v1165 = vunpack.c.l.b16 %v903
    %v1166 = vunpack.c.l.b16 %v904
    %v1167 = vunpack.c.l.b16 %v905
    %v1168 = vunpack.c.l.b16 %v906
    %v1169 = vunpack.c.l.b16 %v907
    %v1170 = vunpack.c.l.b16 %v908
    %v1171 = vunpack.c.l.b16 %v909
    %v1172 = vunpack.c.l.b16 %v910
    %v1173 = vunpack.c.l.b16 %v911
    %v1174 = vunpack.c.l.b16 %v912
    %v1175 = vunpack.c.l.b16 %v913
    %v1176 = vunpack.c.l.b16 %v914
    %v1177 = vunpack.c.l.b16 %v915
    %v1178 = vunpack.c.l.b16 %v916
    %v1179 = vunpack.c.l.b16 %v917
    %v1180 = vunpack.c.l.b16 %v918
    %v1181 = vunpack.c.l.b16 %v919
    %v1182 = vunpack.c.l.b16 %v920
    %v1183 = vunpack.c.l.b16 %v921
    %v1184 = vunpack.c.l.b16 %v922
    %v1185 = vunpack.c.l.b16 %v923
    %v1186 = vunpack.c.l.b16 %v924
    %v1187 = vunpack.c.l.b16 %v925
    %v1188 = vunpack.c.l.b16 %v926
    %v1189 = vunpack.c.l.b16 %v927
    %v1190 = vunpack.c.l.b16 %v928
    %v1191 = vunpack.c.l.b16 %v929
    %v1192 = vunpack.c.l.b16 %v930
    %v1193 = vunpack.c.l.b16 %v931
    %v1194 = vunpack.c.l.b16 %v932
    %v1195 = vunpack.c.l.b16 %v933
    %v1196 = vunpack.c.l.b16 %v934
    %v1197 = vunpack.c.l.b16 %v935
    %v1198 = vpack.c.b16 %v1071, %v1070
    %v1199 = vpack.c.b16 %v1073, %v1072
    %v1200 = vpack.c.b16 %v1075, %v1074
    %v1201 = vpack.c.b16 %v1077, %v1076
    %v1202 = vpack.c.b16 %v1079, %v1078
    %v1203 = vpack.c.b16 %v1081, %v1080
    %v1204 = vpack.c.b16 %v1083, %v1082
    %v1205 = vpack.c.b16 %v1085, %v1084
    %v1206 = vpack.c.b16 %v1087, %v1086
    %v1207 = vpack.c.b16 %v1089, %v1088
    %v1208 = vpack.c.b16 %v1091, %v1090
    %v1209 = vpack.c.b16 %v1093, %v1092
    %v1210 = vpack.c.b16 %v1095, %v1094
    %v1211 = vpack.c.b16 %v1097, %v1096
    %v1212 = vpack.c.b16 %v1099, %v1098
    %v1213 = vpack.c.b16 %v1101, %v1100
    %v1214 = vpack.c.b16 %v1103, %v1102
    %v1215 = vpack.c.b16 %v1105, %v1104
    %v1216 = vpack.c.b16 %v1107, %v1106
    %v1217 = vpack.c.b16 %v1109, %v1108
    %v1218 = vpack.c.b16 %v1111, %v1110
    %v1219 = vpack.c.b16 %v1113, %v1112
    %v1220 = vpack.c.b16 %v1115, %v1114
    %v1221 = vpack.c.b16 %v1117, %v1116
    %v1222 = vpack.c.b16 %v1119, %v1118
    %v1223 = vpack.c.b16 %v1121, %v1120
    %v1224 = vpack.c.b16 %v1123, %v1122
    %v1225 = vpack.c.b16 %v1125, %v1124
    %v1226 = vpack.c.b16 %v1127, %v1126
    %v1227 = vpack.c.b16 %v1129, %v1128
    %v1228 = vpack.c.b16 %v1131, %v1130
    %v1229 = vpack.c.b16 %v1133, %v1132
    %v1230 = vpack.c.b16 %v1135, %v1134
    %v1231 = vpack.c.b16 %v1137, %v1136
    %v1232 = vpack.c.b16 %v1139, %v1138
    %v1233 = vpack.c.b16 %v1141, %v1140
    %v1234 = vpack.c.b16 %v1143, %v1142
    %v1235 = vpack.c.b16 %v1145, %v1144
    %v1236 = vpack.c.b16 %v1147, %v1146
    %v1237 = vpack.c.b16 %v1149, %v1148
    %v1238 = vpack.c.b16 %v1151, %v1150
    %v1239 = vpack.c.b16 %v1153, %v1152
    %v1240 = vpack.c.b16 %v1155, %v1154
    %v1241 = vpack.c.b16 %v1157, %v1156
    %v1242 = vpack.c.b16 %v1159, %v1158
    %v1243 = vpack.c.b16 %v1161, %v1160
    %v1244 = vpack.c.b16 %v1163, %v1162
    %v1245 = vpack.c.b16 %v1165, %v1164
    %v1246 = vpack.c.b16 %v1167, %v1166
    %v1247 = vpack.c.b16 %v1169, %v1168
    %v1248 = vpack.c.b16 %v1171, %v1170
    %v1249 = vpack.c.b16 %v1173, %v1172
    %v1250 = vpack.c.b16 %v1175, %v1174
    %v1251 = vpack.c.b16 %v1177, %v1176
    %v1252 = vpack.c.b16 %v1179, %v1178
    %v1253 = vpack.c.b16 %v1181, %v1180
    %v1254 = vpack.c.b16 %v1183, %v1182
    %v1255 = vpack.c.b16 %v1185, %v1184
    %v1256 = vpack.c.b16 %v1187, %v1186
    %v1257 = vpack.c.b16 %v1189, %v1188
    %v1258 = vpack.c.b16 %v1191, %v1190
    %v1259 = vpack.c.b16 %v1193, %v1192
    %v1260 = vpack.c.b16 %v1195, %v1194
    %v1261 = vpack.c.b16 %v1197, %v1196
    %1326 = vmatprep.subr.bf16.mxu0 0
    %1327 = vmatpush1.bf16.msra.mxu0 %v1198
    %1328 = vmatprep.subr.bf16.mxu0 0
    %1329 = vmatpush1.bf16.msra.mxu0 %v1199
    %1330 = vmatprep.subr.bf16.mxu0 0
    %1331 = vmatpush1.bf16.msra.mxu0 %v1200
    %1332 = vmatprep.subr.bf16.mxu0 0
    %1333 = vmatpush1.bf16.msra.mxu0 %v1201
    %1334 = vmatprep.subr.bf16.mxu0 0
    %1335 = vmatpush1.bf16.msra.mxu0 %v1202
    %1336 = vmatprep.subr.bf16.mxu0 0
    %1337 = vmatpush1.bf16.msra.mxu0 %v1203
    %1338 = vmatprep.subr.bf16.mxu0 0
    %1339 = vmatpush1.bf16.msra.mxu0 %v1204
    %1340 = vmatprep.subr.bf16.mxu0 0
    %1341 = vmatpush1.bf16.msra.mxu0 %v1205
    %1342 = vmatprep.subr.bf16.mxu0 0
    %1343 = vmatpush1.bf16.msra.mxu0 %v1206
    %1344 = vmatprep.subr.bf16.mxu0 0
    %1345 = vmatpush1.bf16.msra.mxu0 %v1207
    %1346 = vmatprep.subr.bf16.mxu0 0
    %1347 = vmatpush1.bf16.msra.mxu0 %v1208
    %1348 = vmatprep.subr.bf16.mxu0 0
    %1349 = vmatpush1.bf16.msra.mxu0 %v1209
    %1350 = vmatprep.subr.bf16.mxu0 0
    %1351 = vmatpush1.bf16.msra.mxu0 %v1210
    %1352 = vmatprep.subr.bf16.mxu0 0
    %1353 = vmatpush1.bf16.msra.mxu0 %v1211
    %1354 = vmatprep.subr.bf16.mxu0 0
    %1355 = vmatpush1.bf16.msra.mxu0 %v1212
    %1356 = vmatprep.subr.bf16.mxu0 0
    %1357 = vmatpush1.bf16.msra.mxu0 %v1213
    %1358 = vmatprep.mubr.bf16.mxu0 %v801
    %1359 = vmatmul.mubr.bf16.gmra.mrb[0].mxu0 %v800
    %v1360 = vpop.f32.mrb[0].mxu0
    %v1361 = vadd.f32 %v940, %v1360
    %v1362 = vpop.f32.mrb[0].mxu0
    %v1363 = vpop.f32.mrb[0].mxu0
    %v1364 = vadd.f32 %v940, %v1363
    %v1365 = vpop.f32.mrb[0].mxu0
    %1366 = vdwg.mxu0
    %1367 = vmatprep.subr.bf16.mxu0 0
    %1368 = vmatpush1.bf16.msra.mxu0 %v1214
    %1369 = vmatprep.subr.bf16.mxu0 0
    %1370 = vmatpush1.bf16.msra.mxu0 %v1215
    %1371 = vmatprep.subr.bf16.mxu0 0
    %1372 = vmatpush1.bf16.msra.mxu0 %v1216
    %1373 = vmatprep.subr.bf16.mxu0 0
    %1374 = vmatpush1.bf16.msra.mxu0 %v1217
    %1375 = vmatprep.subr.bf16.mxu0 0
    %1376 = vmatpush1.bf16.msra.mxu0 %v1218
    %1377 = vmatprep.subr.bf16.mxu0 0
    %1378 = vmatpush1.bf16.msra.mxu0 %v1219
    %1379 = vmatprep.subr.bf16.mxu0 0
    %1380 = vmatpush1.bf16.msra.mxu0 %v1220
    %1381 = vmatprep.subr.bf16.mxu0 0
    %1382 = vmatpush1.bf16.msra.mxu0 %v1221
    %1383 = vmatprep.subr.bf16.mxu0 0
    %1384 = vmatpush1.bf16.msra.mxu0 %v1222
    %1385 = vmatprep.subr.bf16.mxu0 0
    %1386 = vmatpush1.bf16.msra.mxu0 %v1223
    %1387 = vmatprep.subr.bf16.mxu0 0
    %1388 = vmatpush1.bf16.msra.mxu0 %v1224
    %1389 = vmatprep.subr.bf16.mxu0 0
    %1390 = vmatpush1.bf16.msra.mxu0 %v1225
    %1391 = vmatprep.subr.bf16.mxu0 0
    %1392 = vmatpush1.bf16.msra.mxu0 %v1226
    %1393 = vmatprep.subr.bf16.mxu0 0
    %1394 = vmatpush1.bf16.msra.mxu0 %v1227
    %1395 = vmatprep.subr.bf16.mxu0 0
    %1396 = vmatpush1.bf16.msra.mxu0 %v1228
    %1397 = vmatprep.subr.bf16.mxu0 0
    %1398 = vmatpush1.bf16.msra.mxu0 %v1229
    %1399 = vmatprep.mubr.bf16.mxu0 %v803
    %1400 = vmatmul.mubr.bf16.gmra.mrb[0].mxu0 %v802
    %v1401 = vpop.f32.mrb[0].mxu0
    %v1402 = vadd.f32 %v1361, %v1401
    %v1403 = vpop.f32.mrb[0].mxu0
    %v1404 = vpop.f32.mrb[0].mxu0
    %v1405 = vadd.f32 %v1364, %v1404
    %v1406 = vpop.f32.mrb[0].mxu0
    %1407 = vdwg.mxu0
    %1408 = vmatprep.subr.bf16.mxu0 0
    %1409 = vmatpush1.bf16.msra.mxu0 %v1230
    %1410 = vmatprep.subr.bf16.mxu0 0
    %1411 = vmatpush1.bf16.msra.mxu0 %v1231
    %1412 = vmatprep.subr.bf16.mxu0 0
    %1413 = vmatpush1.bf16.msra.mxu0 %v1232
    %1414 = vmatprep.subr.bf16.mxu0 0
    %1415 = vmatpush1.bf16.msra.mxu0 %v1233
    %1416 = vmatprep.subr.bf16.mxu0 0
    %1417 = vmatpush1.bf16.msra.mxu0 %v1234
    %1418 = vmatprep.subr.bf16.mxu0 0
    %1419 = vmatpush1.bf16.msra.mxu0 %v1235
    %1420 = vmatprep.subr.bf16.mxu0 0
    %1421 = vmatpush1.bf16.msra.mxu0 %v1236
    %1422 = vmatprep.subr.bf16.mxu0 0
    %1423 = vmatpush1.bf16.msra.mxu0 %v1237
    %1424 = vmatprep.subr.bf16.mxu0 0
    %1425 = vmatpush1.bf16.msra.mxu0 %v1238
    %1426 = vmatprep.subr.bf16.mxu0 0
    %1427 = vmatpush1.bf16.msra.mxu0 %v1239
    %1428 = vmatprep.subr.bf16.mxu0 0
    %1429 = vmatpush1.bf16.msra.mxu0 %v1240
    %1430 = vmatprep.subr.bf16.mxu0 0
    %1431 = vmatpush1.bf16.msra.mxu0 %v1241
    %1432 = vmatprep.subr.bf16.mxu0 0
    %1433 = vmatpush1.bf16.msra.mxu0 %v1242
    %1434 = vmatprep.subr.bf16.mxu0 0
    %1435 = vmatpush1.bf16.msra.mxu0 %v1243
    %1436 = vmatprep.subr.bf16.mxu0 0
    %1437 = vmatpush1.bf16.msra.mxu0 %v1244
    %1438 = vmatprep.subr.bf16.mxu0 0
    %1439 = vmatpush1.bf16.msra.mxu0 %v1245
    %1440 = vmatprep.mubr.bf16.mxu0 %v805
    %1441 = vmatmul.mubr.bf16.gmra.mrb[0].mxu0 %v804
    %v1442 = vpop.f32.mrb[0].mxu0
    %v1443 = vadd.f32 %v1402, %v1442
    %v1444 = vpop.f32.mrb[0].mxu0
    %v1445 = vpop.f32.mrb[0].mxu0
    %v1446 = vadd.f32 %v1405, %v1445
    %v1447 = vpop.f32.mrb[0].mxu0
    %1448 = vdwg.mxu0
    %1449 = vmatprep.subr.bf16.mxu0 0
    %1450 = vmatpush1.bf16.msra.mxu0 %v1246
    %1451 = vmatprep.subr.bf16.mxu0 0
    %1452 = vmatpush1.bf16.msra.mxu0 %v1247
    %1453 = vmatprep.subr.bf16.mxu0 0
    %1454 = vmatpush1.bf16.msra.mxu0 %v1248
    %1455 = vmatprep.subr.bf16.mxu0 0
    %1456 = vmatpush1.bf16.msra.mxu0 %v1249
    %1457 = vmatprep.subr.bf16.mxu0 0
    %1458 = vmatpush1.bf16.msra.mxu0 %v1250
    %1459 = vmatprep.subr.bf16.mxu0 0
    %1460 = vmatpush1.bf16.msra.mxu0 %v1251
    %1461 = vmatprep.subr.bf16.mxu0 0
    %1462 = vmatpush1.bf16.msra.mxu0 %v1252
    %1463 = vmatprep.subr.bf16.mxu0 0
    %1464 = vmatpush1.bf16.msra.mxu0 %v1253
    %1465 = vmatprep.subr.bf16.mxu0 0
    %1466 = vmatpush1.bf16.msra.mxu0 %v1254
    %1467 = vmatprep.subr.bf16.mxu0 0
    %1468 = vmatpush1.bf16.msra.mxu0 %v1255
    %1469 = vmatprep.subr.bf16.mxu0 0
    %1470 = vmatpush1.bf16.msra.mxu0 %v1256
    %1471 = vmatprep.subr.bf16.mxu0 0
    %1472 = vmatpush1.bf16.msra.mxu0 %v1257
    %1473 = vmatprep.subr.bf16.mxu0 0
    %1474 = vmatpush1.bf16.msra.mxu0 %v1258
    %1475 = vmatprep.subr.bf16.mxu0 0
    %1476 = vmatpush1.bf16.msra.mxu0 %v1259
    %1477 = vmatprep.subr.bf16.mxu0 0
    %1478 = vmatpush1.bf16.msra.mxu0 %v1260
    %1479 = vmatprep.subr.bf16.mxu0 0
    %1480 = vmatpush1.bf16.msra.mxu0 %v1261
    %1481 = vmatprep.mubr.bf16.mxu0 %v807
    %1482 = vmatmul.mubr.bf16.gmra.mrb[0].mxu0 %v806
    %v1483 = vpop.f32.mrb[0].mxu0
    %v1484 = vadd.f32 %v1443, %v1483
    %v1485 = vpop.f32.mrb[0].mxu0
    %v1486 = vpop.f32.mrb[0].mxu0
    %v1487 = vadd.f32 %v1446, %v1486
    %v1488 = vpop.f32.mrb[0].mxu0
    %1489 = vdwg.mxu0
    %1490 = vst [vmem:[%s5] sm:$0xff] %v1484
    %1491 = vst [vmem:[%s5 + $0x8] sm:$0xff] %v1487
    // Predicated region
    $region34: #{dueling_dqn_forward.1} parent=1 // pred_check
      _
    $region35: #{dueling_dqn_forward.1} parent=1 // pred_check_branch
      %1493 = sbr.rel (0) target = $region37
    $region36: #{dueling_dqn_forward.1} parent=1 // pred_region
      _
    $region37: #{dueling_dqn_forward.1} parent=1 // pred_fallthru
      _
    // Predicated region
    $region38: #{dueling_dqn_forward.1} parent=1 // pred_check
      _
    $region39: #{dueling_dqn_forward.1} parent=1 // pred_check_branch
      %1495 = sbr.rel (0) target = $region41
    $region40: #{dueling_dqn_forward.1} parent=1 // pred_region
      _
    $region41: #{dueling_dqn_forward.1} parent=1 // pred_fallthru
      _
    %1496 = vsyncpa [#allocation3], 1
    %1497 = vsyncpa [#allocation5], 1

</llo_original>
